<compile_context>
chip_gen: v7x
topology: tpu7x:2x2x1
jax: 0.10.0
libtpu: 0.0.40
codegen_flags: <defaults>
</compile_context>

<pallas_src>
import functools

import numpy as np
import jax
import jax.numpy as jnp
from jax.experimental import pallas as pl
from jax.experimental.pallas import tpu as pltpu


def _full_spec(shape):
    # whole-array block on a 1-step grid (small shapes; full-array blocks are legal)
    nd = len(shape)
    return pl.BlockSpec(shape, lambda i, nd=nd: (0,) * nd)


def _pairnet_kernel(num_pairs,
                    rT_ref, w1_ref, b1_ref, w2_ref, b2_ref, w3_ref, b3_ref,
                    xyzT_ref, sel_ref, o_ref):
    """Fused PairNet forward.

    Layout: atoms ride the lane axis for the MLP, pairs ride the lane axis for the LJ part.
      rT_ref   : (Fr, N)        per-atom features, transposed
      w*_ref   : transposed, fused (sigma||epsilon) predictor weights
      xyzT_ref : (3, N)         coordinates, transposed
      sel_ref  : (2, N, P)      float one-hot gather matrices for pair index i / j
      o_ref    : (1, M)         per-molecule LJ energies (lane-dense)
    """
    # ---- fused sigma/epsilon ParameterPredictor MLPs (Linear->Tanh->Linear->Tanh->Linear) ----
    h = jnp.tanh(jnp.dot(w1_ref[...], rT_ref[...],
                         preferred_element_type=jnp.float32) + b1_ref[...])        # (2H1, N)
    h = jnp.tanh(jnp.dot(w2_ref[...], h,
                         preferred_element_type=jnp.float32) + b2_ref[...])        # (2H2, N)
    predT = jnp.dot(w3_ref[...], h,
                    preferred_element_type=jnp.float32) + b3_ref[...]              # (2, N)

    # same parameter transforms as PairNet.forward
    sigT = 4.0 + 10.0 * predT[0:1, :] * predT[0:1, :]                               # (1, N)
    epsT = 0.1 * predT[1:2, :] * predT[1:2, :]                                      # (1, N)

    # ---- in-kernel pair gather via selection matmuls (pairs ride lanes) ----
    feats = jnp.concatenate([xyzT_ref[...], sigT, epsT], axis=0)                    # (5, N)
    gi = jnp.dot(feats, sel_ref[0], preferred_element_type=jnp.float32)             # (5, P)
    gj = jnp.dot(feats, sel_ref[1], preferred_element_type=jnp.float32)             # (5, P)

    # ---- LJ energy per pair (pure VPU row ops; no rsqrt / sigma-sqrt needed) ----
    dx = gj[0:1, :] - gi[0:1, :]
    dy = gj[1:2, :] - gi[1:2, :]
    dz = gj[2:3, :] - gi[2:3, :]
    d2 = dx * dx + dy * dy + dz * dz                                                # (1, P)
    sig_prod = gi[3:4, :] * gj[3:4, :]      # sigma_i * sigma_j   = sigma_mixed^2
    eps_prod = gi[4:5, :] * gj[4:5, :]      # eps_i   * eps_j     = epsilon_mixed^2
    x2 = sig_prod / d2                      # = (sigma_mixed / d)^2
    x6 = x2 * x2 * x2
    e_pair = 4.0 * jnp.sqrt(eps_prod) * (x6 * x6 - x6)                              # (1, P)

    # ---- contiguous per-molecule segment sums (num_pairs is a static Python tuple) ----
    p_total = e_pair.shape[1]
    lane = jax.lax.broadcasted_iota(jnp.int32, (1, p_total), 1)
    sums = []
    off = 0
    for n in num_pairs:
        mask = (lane >= off) & (lane < off + n)
        sums.append(jnp.sum(jnp.where(mask, e_pair, 0.0), axis=1, keepdims=True))   # (1, 1)
        off += n
    o_ref[...] = jnp.concatenate(sums, axis=1)                                      # (1, M)


def _combine_predictor_params(sigma_params, epsilon_params):
    """Fuse the two ParameterPredictor weight sets into one transposed MLP.

    Layer 1: columns concatenated, layers 2/3: block-diagonal, so column 0 of the
    2-wide head is the sigma prediction and column 1 is the epsilon prediction.
    Returned transposed so the kernel can run W @ x^T with atoms on the lane axis.
    """
    w1s, b1s, w2s, b2s, w3s, b3s = sigma_params
    w1e, b1e, w2e, b2e, w3e, b3e = epsilon_params
    H1, H2 = w2s.shape

    w1c = jnp.concatenate([w1s, w1e], axis=1)                     # (Fr, 2H1)
    b1c = jnp.concatenate([b1s, b1e], axis=1)                     # (1, 2H1)
    w2c = jnp.zeros((2 * H1, 2 * H2), jnp.float32)
    w2c = w2c.at[:H1, :H2].set(w2s).at[H1:, H2:].set(w2e)         # (2H1, 2H2)
    b2c = jnp.concatenate([b2s, b2e], axis=1)                     # (1, 2H2)
    w3c = jnp.zeros((2 * H2, 2), jnp.float32)
    w3c = w3c.at[:H2, 0:1].set(w3s).at[H2:, 1:2].set(w3e)         # (2H2, 2)
    b3c = jnp.concatenate([b3s, b3e], axis=1)                     # (1, 2)
    return (w1c.T, b1c.T, w2c.T, b2c.T, w3c.T, b3c.T)


def pair_net_forward(r, pairs, num_pairs, xyz, sigma_params, epsilon_params):
    """Pallas implementation of PairNet.forward (terms=['LJ'], trainable=True)."""
    M = len(num_pairs)
    N = xyz.shape[0]

    w1t, b1t, w2t, b2t, w3t, b3t = _combine_predictor_params(sigma_params, epsilon_params)
    rT = r.T                                                      # (Fr, N)
    xyzT = xyz.T                                                  # (3, N)
    sel_i = jax.nn.one_hot(pairs[:, 0], N, dtype=jnp.float32).T   # (N, P)
    sel_j = jax.nn.one_hot(pairs[:, 1], N, dtype=jnp.float32).T   # (N, P)
    sel = jnp.stack([sel_i, sel_j], axis=0)                       # (2, N, P)

    kernel = functools.partial(_pairnet_kernel, tuple(int(n) for n in num_pairs))
    inputs = (rT, w1t, b1t, w2t, b2t, w3t, b3t, xyzT, sel)

    # TODO(synk): at production scale, grid over pair tiles / molecules with a "parallel"
    # axis (v7x megacore) and re-size tiles for v7x's 64 MiB VMEM; at these shapes a single
    # fused step is optimal.
    out = pl.pallas_call(
        kernel,
        out_shape=jax.ShapeDtypeStruct((1, M), jnp.float32),
        grid=(1,),
        in_specs=[_full_spec(a.shape) for a in inputs],
        out_specs=_full_spec((1, M)),
        compiler_params=pltpu.CompilerParams(dimension_semantics=("arbitrary",)),
    )(*inputs)
    return out.T                                                  # (M, 1), matches torch output


def pair_net_reference(r, pairs, num_pairs, xyz, sigma_params, epsilon_params):
    """Pure-JAX transcription of the PyTorch forward (for validation)."""
    def mlp(x, params):
        w1, b1, w2, b2, w3, b3 = params
        h = jnp.tanh(x @ w1 + b1)
        h = jnp.tanh(h @ w2 + b2)
        return h @ w3 + b3

    N = xyz.shape[0]
    disp = jnp.broadcast_to(xyz[:, None, :], (N, N, 3))
    disp = -(disp - jnp.transpose(disp, (1, 0, 2)))
    D2 = jnp.sum(disp ** 2, axis=2)
    D2 = D2[pairs[:, 0], pairs[:, 1]].reshape(-1, 1)
    inv_D = D2 ** -0.5
    sigma = 4.0 + 10.0 * mlp(r, sigma_params) ** 2
    epsilon = 0.1 * mlp(r, epsilon_params) ** 2
    sigma_mixed = jnp.prod(sigma[pairs], axis=1) ** 0.5
    epsilon_mixed = jnp.prod(epsilon[pairs], axis=1) ** 0.5
    D_inv_scal = sigma_mixed * inv_D
    E = 4.0 * epsilon_mixed * (D_inv_scal ** 12 - D_inv_scal ** 6)
    splits = np.cumsum(num_pairs)[:-1].tolist()
    return jnp.stack([e.sum(0) for e in jnp.split(E, splits)])


if __name__ == "__main__":
    key = jax.random.PRNGKey(0)
    Fr = 32
    Lh = [32, 32]
    atoms_per_mol = 8
    M = 2                       # number of molecules in the batch
    N = atoms_per_mol * M       # total atoms

    def init_params(k, scale=0.05):
        ks = jax.random.split(k, 6)
        dims = [Fr] + Lh + [1]
        params = []
        for idx in range(3):
            w = scale * jax.random.normal(ks[2 * idx], (dims[idx], dims[idx + 1]),
                                          jnp.float32)
            b = scale * jax.random.normal(ks[2 * idx + 1], (1, dims[idx + 1]),
                                          jnp.float32)
            params += [w, b]
        return tuple(params)

    k1, k2, k3, k4 = jax.random.split(key, 4)
    sigma_params = init_params(k1)
    epsilon_params = init_params(k2)

    # per-atom features r: (N, Fr)
    r = jax.random.normal(k3, (N, Fr), jnp.float32)

    # coordinates on a jittered grid so distances stay O(1): (N, 3)
    grid_pts = np.array([[ix, iy, iz]
                         for ix in range(4) for iy in range(2) for iz in range(2)],
                        dtype=np.float32)
    xyz = jnp.asarray(2.5 * grid_pts) + 0.3 * jax.random.normal(k4, (N, 3), jnp.float32)

    # batch['pairs'] / batch['num_pairs']: all intra-molecule pairs (i < j)
    pairs_list, num_pairs = [], []
    for m in range(M):
        idx = list(range(m * atoms_per_mol, (m + 1) * atoms_per_mol))
        mol_pairs = [(a, b) for a in idx for b in idx if a < b]
        pairs_list += mol_pairs
        num_pairs.append(len(mol_pairs))
    pairs = jnp.asarray(np.array(pairs_list, dtype=np.int32))

    out = pair_net_forward(r, pairs, num_pairs, xyz, sigma_params, epsilon_params)
    out = jax.block_until_ready(out)

    ref = pair_net_reference(r, pairs, num_pairs, xyz, sigma_params, epsilon_params)
    np.testing.assert_allclose(np.asarray(out), np.asarray(ref), rtol=1e-2, atol=1e-3)

    print("KERNEL_OK")
</pallas_src>

<mosaic_0001>
module attributes {stable_mosaic.version = 11 : i64} {
  func.func @_pairnet_kernel(%arg0: i32, %arg1: memref<32x16xf32, #tpu.memory_space<vmem>>, %arg2: memref<64x32xf32, #tpu.memory_space<vmem>>, %arg3: memref<64x1xf32, #tpu.memory_space<vmem>>, %arg4: memref<64x64xf32, #tpu.memory_space<vmem>>, %arg5: memref<64x1xf32, #tpu.memory_space<vmem>>, %arg6: memref<2x64xf32, #tpu.memory_space<vmem>>, %arg7: memref<2x1xf32, #tpu.memory_space<vmem>>, %arg8: memref<3x16xf32, #tpu.memory_space<vmem>>, %arg9: memref<2x16x56xf32, #tpu.memory_space<vmem>>, %arg10: memref<1x2xf32, #tpu.memory_space<vmem>>) attributes {dimension_semantics = [#tpu.dimension_semantics<arbitrary>], iteration_bounds = array<i64: 1>, scalar_prefetch = 0 : i64, scratch_operands = 0 : i64, tpu.core_type = #tpu.core_type<tc>, window_params = [{pipeline_mode = #tpu.pipeline_mode<synchronous>, transform_indices = @transform_0, window_bounds = array<i64: 32, 16>}, {pipeline_mode = #tpu.pipeline_mode<synchronous>, transform_indices = @transform_1, window_bounds = array<i64: 64, 32>}, {pipeline_mode = #tpu.pipeline_mode<synchronous>, transform_indices = @transform_2, window_bounds = array<i64: 64, 1>}, {pipeline_mode = #tpu.pipeline_mode<synchronous>, transform_indices = @transform_3, window_bounds = array<i64: 64, 64>}, {pipeline_mode = #tpu.pipeline_mode<synchronous>, transform_indices = @transform_4, window_bounds = array<i64: 64, 1>}, {pipeline_mode = #tpu.pipeline_mode<synchronous>, transform_indices = @transform_5, window_bounds = array<i64: 2, 64>}, {pipeline_mode = #tpu.pipeline_mode<synchronous>, transform_indices = @transform_6, window_bounds = array<i64: 2, 1>}, {pipeline_mode = #tpu.pipeline_mode<synchronous>, transform_indices = @transform_7, window_bounds = array<i64: 3, 16>}, {pipeline_mode = #tpu.pipeline_mode<synchronous>, transform_indices = @transform_8, window_bounds = array<i64: 2, 16, 56>}, {pipeline_mode = #tpu.pipeline_mode<synchronous>, transform_indices = @transform_9, window_bounds = array<i64: 1, 2>}]} {
    %c0 = arith.constant 0 : index
    %c0_0 = arith.constant 0 : index
    %0 = vector.load %arg2[%c0, %c0_0] : memref<64x32xf32, #tpu.memory_space<vmem>>, vector<64x32xf32>
    %c0_1 = arith.constant 0 : index
    %c0_2 = arith.constant 0 : index
    %1 = vector.load %arg1[%c0_1, %c0_2] : memref<32x16xf32, #tpu.memory_space<vmem>>, vector<32x16xf32>
    %cst = arith.constant dense<0.000000e+00> : vector<64x16xf32>
    %2 = tpu.matmul %0, %1, %cst {dimension_numbers = #tpu.dot_dimension_numbers<[1], [0], [0], [1], [0, 0, 1, 1], [], []>} : vector<64x32xf32>, vector<32x16xf32>, vector<64x16xf32> -> vector<64x16xf32>
    %c0_3 = arith.constant 0 : index
    %c0_4 = arith.constant 0 : index
    %3 = vector.load %arg3[%c0_3, %c0_4] : memref<64x1xf32, #tpu.memory_space<vmem>>, vector<64x1xf32>
    %4 = vector.broadcast %3 : vector<64x1xf32> to vector<64x16xf32>
    %5 = arith.addf %2, %4 : vector<64x16xf32>
    %6 = math.tanh %5 : vector<64x16xf32>
    %c0_5 = arith.constant 0 : index
    %c0_6 = arith.constant 0 : index
    %7 = vector.load %arg4[%c0_5, %c0_6] : memref<64x64xf32, #tpu.memory_space<vmem>>, vector<64x64xf32>
    %cst_7 = arith.constant dense<0.000000e+00> : vector<64x16xf32>
    %8 = tpu.matmul %7, %6, %cst_7 {dimension_numbers = #tpu.dot_dimension_numbers<[1], [0], [0], [1], [0, 0, 1, 1], [], []>} : vector<64x64xf32>, vector<64x16xf32>, vector<64x16xf32> -> vector<64x16xf32>
    %c0_8 = arith.constant 0 : index
    %c0_9 = arith.constant 0 : index
    %9 = vector.load %arg5[%c0_8, %c0_9] : memref<64x1xf32, #tpu.memory_space<vmem>>, vector<64x1xf32>
    %10 = vector.broadcast %9 : vector<64x1xf32> to vector<64x16xf32>
    %11 = arith.addf %8, %10 : vector<64x16xf32>
    %12 = math.tanh %11 : vector<64x16xf32>
    %c0_10 = arith.constant 0 : index
    %c0_11 = arith.constant 0 : index
    %13 = vector.load %arg6[%c0_10, %c0_11] : memref<2x64xf32, #tpu.memory_space<vmem>>, vector<2x64xf32>
    %cst_12 = arith.constant dense<0.000000e+00> : vector<2x16xf32>
    %14 = tpu.matmul %13, %12, %cst_12 {dimension_numbers = #tpu.dot_dimension_numbers<[1], [0], [0], [1], [0, 0, 1, 1], [], []>} : vector<2x64xf32>, vector<64x16xf32>, vector<2x16xf32> -> vector<2x16xf32>
    %c0_13 = arith.constant 0 : index
    %c0_14 = arith.constant 0 : index
    %15 = vector.load %arg7[%c0_13, %c0_14] : memref<2x1xf32, #tpu.memory_space<vmem>>, vector<2x1xf32>
    %16 = vector.broadcast %15 : vector<2x1xf32> to vector<2x16xf32>
    %17 = arith.addf %14, %16 : vector<2x16xf32>
    %18 = vector.extract_strided_slice %17 {offsets = [0, 0], sizes = [1, 16], strides = [1, 1]} : vector<2x16xf32> to vector<1x16xf32>
    %cst_15 = arith.constant 1.000000e+01 : f32
    %19 = vector.broadcast %cst_15 : f32 to vector<1x16xf32>
    %20 = arith.mulf %19, %18 : vector<1x16xf32>
    %21 = vector.extract_strided_slice %17 {offsets = [0, 0], sizes = [1, 16], strides = [1, 1]} : vector<2x16xf32> to vector<1x16xf32>
    %22 = arith.mulf %20, %21 : vector<1x16xf32>
    %cst_16 = arith.constant 4.000000e+00 : f32
    %23 = vector.broadcast %cst_16 : f32 to vector<1x16xf32>
    %24 = arith.addf %23, %22 : vector<1x16xf32>
    %25 = vector.extract_strided_slice %17 {offsets = [1, 0], sizes = [1, 16], strides = [1, 1]} : vector<2x16xf32> to vector<1x16xf32>
    %cst_17 = arith.constant 1.000000e-01 : f32
    %26 = vector.broadcast %cst_17 : f32 to vector<1x16xf32>
    %27 = arith.mulf %26, %25 : vector<1x16xf32>
    %28 = vector.extract_strided_slice %17 {offsets = [1, 0], sizes = [1, 16], strides = [1, 1]} : vector<2x16xf32> to vector<1x16xf32>
    %29 = arith.mulf %27, %28 : vector<1x16xf32>
    %c0_18 = arith.constant 0 : index
    %c0_19 = arith.constant 0 : index
    %30 = vector.load %arg8[%c0_18, %c0_19] : memref<3x16xf32, #tpu.memory_space<vmem>>, vector<3x16xf32>
    %31 = tpu.concatenate %30, %24, %29 in 0 : vector<3x16xf32>, vector<1x16xf32>, vector<1x16xf32> -> vector<5x16xf32>
    %c0_20 = arith.constant 0 : index
    %c0_21 = arith.constant 0 : index
    %c0_22 = arith.constant 0 : index
    %32 = vector.load %arg9[%c0_20, %c0_21, %c0_22] : memref<2x16x56xf32, #tpu.memory_space<vmem>>, vector<1x16x56xf32>
    %33 = vector.shape_cast %32 : vector<1x16x56xf32> to vector<16x56xf32>
    %cst_23 = arith.constant dense<0.000000e+00> : vector<5x56xf32>
    %34 = tpu.matmul %31, %33, %cst_23 {dimension_numbers = #tpu.dot_dimension_numbers<[1], [0], [0], [1], [0, 0, 1, 1], [], []>} : vector<5x16xf32>, vector<16x56xf32>, vector<5x56xf32> -> vector<5x56xf32>
    %c1 = arith.constant 1 : index
    %c0_24 = arith.constant 0 : index
    %c0_25 = arith.constant 0 : index
    %35 = vector.load %arg9[%c1, %c0_24, %c0_25] : memref<2x16x56xf32, #tpu.memory_space<vmem>>, vector<1x16x56xf32>
    %36 = vector.shape_cast %35 : vector<1x16x56xf32> to vector<16x56xf32>
    %cst_26 = arith.constant dense<0.000000e+00> : vector<5x56xf32>
    %37 = tpu.matmul %31, %36, %cst_26 {dimension_numbers = #tpu.dot_dimension_numbers<[1], [0], [0], [1], [0, 0, 1, 1], [], []>} : vector<5x16xf32>, vector<16x56xf32>, vector<5x56xf32> -> vector<5x56xf32>
    %38 = vector.extract_strided_slice %37 {offsets = [0, 0], sizes = [1, 56], strides = [1, 1]} : vector<5x56xf32> to vector<1x56xf32>
    %39 = vector.extract_strided_slice %34 {offsets = [0, 0], sizes = [1, 56], strides = [1, 1]} : vector<5x56xf32> to vector<1x56xf32>
    %40 = arith.subf %38, %39 : vector<1x56xf32>
    %41 = vector.extract_strided_slice %37 {offsets = [1, 0], sizes = [1, 56], strides = [1, 1]} : vector<5x56xf32> to vector<1x56xf32>
    %42 = vector.extract_strided_slice %34 {offsets = [1, 0], sizes = [1, 56], strides = [1, 1]} : vector<5x56xf32> to vector<1x56xf32>
    %43 = arith.subf %41, %42 : vector<1x56xf32>
    %44 = vector.extract_strided_slice %37 {offsets = [2, 0], sizes = [1, 56], strides = [1, 1]} : vector<5x56xf32> to vector<1x56xf32>
    %45 = vector.extract_strided_slice %34 {offsets = [2, 0], sizes = [1, 56], strides = [1, 1]} : vector<5x56xf32> to vector<1x56xf32>
    %46 = arith.subf %44, %45 : vector<1x56xf32>
    %47 = arith.mulf %40, %40 : vector<1x56xf32>
    %48 = arith.mulf %43, %43 : vector<1x56xf32>
    %49 = arith.addf %47, %48 : vector<1x56xf32>
    %50 = arith.mulf %46, %46 : vector<1x56xf32>
    %51 = arith.addf %49, %50 : vector<1x56xf32>
    %52 = vector.extract_strided_slice %34 {offsets = [3, 0], sizes = [1, 56], strides = [1, 1]} : vector<5x56xf32> to vector<1x56xf32>
    %53 = vector.extract_strided_slice %37 {offsets = [3, 0], sizes = [1, 56], strides = [1, 1]} : vector<5x56xf32> to vector<1x56xf32>
    %54 = arith.mulf %52, %53 : vector<1x56xf32>
    %55 = vector.extract_strided_slice %34 {offsets = [4, 0], sizes = [1, 56], strides = [1, 1]} : vector<5x56xf32> to vector<1x56xf32>
    %56 = vector.extract_strided_slice %37 {offsets = [4, 0], sizes = [1, 56], strides = [1, 1]} : vector<5x56xf32> to vector<1x56xf32>
    %57 = arith.mulf %55, %56 : vector<1x56xf32>
    %58 = arith.divf %54, %51 : vector<1x56xf32>
    %59 = arith.mulf %58, %58 : vector<1x56xf32>
    %60 = arith.mulf %59, %58 : vector<1x56xf32>
    %61 = math.sqrt %57 : vector<1x56xf32>
    %cst_27 = arith.constant 4.000000e+00 : f32
    %62 = vector.broadcast %cst_27 : f32 to vector<1x56xf32>
    %63 = arith.mulf %62, %61 : vector<1x56xf32>
    %64 = arith.mulf %60, %60 : vector<1x56xf32>
    %65 = arith.subf %64, %60 : vector<1x56xf32>
    %66 = arith.mulf %63, %65 : vector<1x56xf32>
    %67 = tpu.iota {dimensions = array<i32: 1>} : vector<1x56xi32>
    %c0_i32 = arith.constant 0 : i32
    %68 = vector.broadcast %c0_i32 : i32 to vector<1x56xi32>
    %69 = arith.cmpi sge, %67, %68 : vector<1x56xi32>
    %c28_i32 = arith.constant 28 : i32
    %70 = vector.broadcast %c28_i32 : i32 to vector<1x56xi32>
    %71 = arith.cmpi slt, %67, %70 : vector<1x56xi32>
    %72 = arith.andi %69, %71 : vector<1x56xi1>
    %cst_28 = arith.constant 0.000000e+00 : f32
    %73 = vector.broadcast %cst_28 : f32 to vector<1x56xf32>
    %74 = arith.select %72, %66, %73 : vector<1x56xi1>, vector<1x56xf32>
    %cst_29 = arith.constant dense<0.000000e+00> : vector<1xf32>
    %75 = vector.multi_reduction <add>, %74, %cst_29 [1] : vector<1x56xf32> to vector<1xf32>
    %76 = vector.shape_cast %75 : vector<1xf32> to vector<1x1xf32>
    %c28_i32_30 = arith.constant 28 : i32
    %77 = vector.broadcast %c28_i32_30 : i32 to vector<1x56xi32>
    %78 = arith.cmpi sge, %67, %77 : vector<1x56xi32>
    %c56_i32 = arith.constant 56 : i32
    %79 = vector.broadcast %c56_i32 : i32 to vector<1x56xi32>
    %80 = arith.cmpi slt, %67, %79 : vector<1x56xi32>
    %81 = arith.andi %78, %80 : vector<1x56xi1>
    %cst_31 = arith.constant 0.000000e+00 : f32
    %82 = vector.broadcast %cst_31 : f32 to vector<1x56xf32>
    %83 = arith.select %81, %66, %82 : vector<1x56xi1>, vector<1x56xf32>
    %cst_32 = arith.constant dense<0.000000e+00> : vector<1xf32>
    %84 = vector.multi_reduction <add>, %83, %cst_32 [1] : vector<1x56xf32> to vector<1xf32>
    %85 = vector.shape_cast %84 : vector<1xf32> to vector<1x1xf32>
    %86 = tpu.concatenate %76, %85 in 1 : vector<1x1xf32>, vector<1x1xf32> -> vector<1x2xf32>
    %c0_33 = arith.constant 0 : index
    %c0_34 = arith.constant 0 : index
    %87 = vector.load %arg10[%c0_33, %c0_34] : memref<1x2xf32, #tpu.memory_space<vmem>>, vector<1x2xf32>
    tpu.vector_store %arg10[%c0_33, %c0_34], %86 {strides = array<i32>} : memref<1x2xf32, #tpu.memory_space<vmem>>, vector<1x2xf32>,
    return
  }
  func.func @transform_0(%arg0: i32) -> (i32, i32) {
    %c0_i32 = arith.constant 0 : i32
    %c0_i32_0 = arith.constant 0 : i32
    %c0_i32_1 = arith.constant 0 : i32
    return %c0_i32, %c0_i32_0 : i32, i32
  }
  func.func @transform_1(%arg0: i32) -> (i32, i32) {
    %c0_i32 = arith.constant 0 : i32
    %c0_i32_0 = arith.constant 0 : i32
    %c0_i32_1 = arith.constant 0 : i32
    return %c0_i32, %c0_i32_0 : i32, i32
  }
  func.func @transform_2(%arg0: i32) -> (i32, i32) {
    %c0_i32 = arith.constant 0 : i32
    %c0_i32_0 = arith.constant 0 : i32
    %c0_i32_1 = arith.constant 0 : i32
    return %c0_i32, %c0_i32_0 : i32, i32
  }
  func.func @transform_3(%arg0: i32) -> (i32, i32) {
    %c0_i32 = arith.constant 0 : i32
    %c0_i32_0 = arith.constant 0 : i32
    %c0_i32_1 = arith.constant 0 : i32
    return %c0_i32, %c0_i32_0 : i32, i32
  }
  func.func @transform_4(%arg0: i32) -> (i32, i32) {
    %c0_i32 = arith.constant 0 : i32
    %c0_i32_0 = arith.constant 0 : i32
    %c0_i32_1 = arith.constant 0 : i32
    return %c0_i32, %c0_i32_0 : i32, i32
  }
  func.func @transform_5(%arg0: i32) -> (i32, i32) {
    %c0_i32 = arith.constant 0 : i32
    %c0_i32_0 = arith.constant 0 : i32
    %c0_i32_1 = arith.constant 0 : i32
    return %c0_i32, %c0_i32_0 : i32, i32
  }
  func.func @transform_6(%arg0: i32) -> (i32, i32) {
    %c0_i32 = arith.constant 0 : i32
    %c0_i32_0 = arith.constant 0 : i32
    %c0_i32_1 = arith.constant 0 : i32
    return %c0_i32, %c0_i32_0 : i32, i32
  }
  func.func @transform_7(%arg0: i32) -> (i32, i32) {
    %c0_i32 = arith.constant 0 : i32
    %c0_i32_0 = arith.constant 0 : i32
    %c0_i32_1 = arith.constant 0 : i32
    return %c0_i32, %c0_i32_0 : i32, i32
  }
  func.func @transform_8(%arg0: i32) -> (i32, i32, i32) {
    %c0_i32 = arith.constant 0 : i32
    %c0_i32_0 = arith.constant 0 : i32
    %c0_i32_1 = arith.constant 0 : i32
    %c0_i32_2 = arith.constant 0 : i32
    return %c0_i32, %c0_i32_0, %c0_i32_1 : i32, i32, i32
  }
  func.func @transform_9(%arg0: i32) -> (i32, i32) {
    %c0_i32 = arith.constant 0 : i32
    %c0_i32_0 = arith.constant 0 : i32
    %c0_i32_1 = arith.constant 0 : i32
    return %c0_i32, %c0_i32_0 : i32, i32
  }
}

</mosaic_0001>

<llo_original>
// kernel: tpu_custom_call.1
$region0: #{tpu_custom_call.1}
  #allocation0 [shape = 'u32[]', space=smem, size = 0x4, offset = 0x4, fixed_abs, tag = 'smem constant byte address 0x4 - core index']
  #allocation1 [shape = 'u32[144,128]{1,0:T(1,128)}', space=vmem, size = 0x12000, scoped, tag = 'internal scratch']
  %s0 = inlined_call_operand.vmem [shape: f32[32,16], index: 0, kind: input, shape index: {}]
  %s1 = inlined_call_operand.vmem [shape: f32[64,32], index: 1, kind: input, shape index: {}]
  %s2 = inlined_call_operand.vmem [shape: f32[64,1], index: 2, kind: input, shape index: {}]
  %s3 = inlined_call_operand.vmem [shape: f32[64,64], index: 3, kind: input, shape index: {}]
  %s4 = inlined_call_operand.vmem [shape: f32[64,1], index: 4, kind: input, shape index: {}]
  %s5 = inlined_call_operand.vmem [shape: f32[2,64], index: 5, kind: input, shape index: {}]
  %s6 = inlined_call_operand.vmem [shape: f32[2,1], index: 6, kind: input, shape index: {}]
  %s7 = inlined_call_operand.vmem [shape: f32[3,16], index: 7, kind: input, shape index: {}]
  %s8 = inlined_call_operand.vmem [shape: f32[2,16,56], index: 8, kind: input, shape index: {}]
  %s9 = inlined_call_operand.hbm [shape: f32[1,2], index: 9, kind: output, shape index: {}]
  %s10 = sld [smem:[#allocation0]]
  $region46: #{tpu_custom_call.1} parent=0
    _
  %s12 = ssub.s32 1, %s10
  %s13 = scalar_select 0, %s12, %s10
  $region1: #{tpu_custom_call.1} parent=0
    #allocation2 [shape = 'u8[512]{0}', space=vmem, size = 0x400, scoped, tag = 'output window, operand 0, single buffered']
    #allocation3 [shape = 's32[1]{0}', space=sflag, size = 0x4, scoped, tag = 'scoped memory for tpu_custom_call.1']
    %14 = vsyncpa [#allocation3], 0
    // Predicated region
    $region2: #{tpu_custom_call.1} parent=1 // pred_check
      _
    $region3: #{tpu_custom_call.1} parent=1 // pred_check_branch
      %16 = sbr.rel (0) target = $region5
    $region4: #{tpu_custom_call.1} parent=1 // pred_region
      _
    $region5: #{tpu_custom_call.1} parent=1 // pred_fallthru
      _
    // Predicated region
    $region6: #{tpu_custom_call.1} parent=1 // pred_check
      _
    $region7: #{tpu_custom_call.1} parent=1 // pred_check_branch
      %18 = sbr.rel (0) target = $region9
    $region8: #{tpu_custom_call.1} parent=1 // pred_region
      _
    $region9: #{tpu_custom_call.1} parent=1 // pred_fallthru
      _
    // Predicated region
    $region10: #{tpu_custom_call.1} parent=1 // pred_check
      _
    $region11: #{tpu_custom_call.1} parent=1 // pred_check_branch
      %20 = sbr.rel (0) target = $region13
    $region12: #{tpu_custom_call.1} parent=1 // pred_region
      _
    $region13: #{tpu_custom_call.1} parent=1 // pred_fallthru
      _
    // Predicated region
    $region14: #{tpu_custom_call.1} parent=1 // pred_check
      _
    $region15: #{tpu_custom_call.1} parent=1 // pred_check_branch
      %22 = sbr.rel (0) target = $region17
    $region16: #{tpu_custom_call.1} parent=1 // pred_region
      _
    $region17: #{tpu_custom_call.1} parent=1 // pred_fallthru
      _
    // Predicated region
    $region18: #{tpu_custom_call.1} parent=1 // pred_check
      _
    $region19: #{tpu_custom_call.1} parent=1 // pred_check_branch
      %24 = sbr.rel (0) target = $region21
    $region20: #{tpu_custom_call.1} parent=1 // pred_region
      _
    $region21: #{tpu_custom_call.1} parent=1 // pred_fallthru
      _
    // Predicated region
    $region22: #{tpu_custom_call.1} parent=1 // pred_check
      _
    $region23: #{tpu_custom_call.1} parent=1 // pred_check_branch
      %26 = sbr.rel (0) target = $region25
    $region24: #{tpu_custom_call.1} parent=1 // pred_region
      _
    $region25: #{tpu_custom_call.1} parent=1 // pred_fallthru
      _
    // Predicated region
    $region26: #{tpu_custom_call.1} parent=1 // pred_check
      _
    $region27: #{tpu_custom_call.1} parent=1 // pred_check_branch
      %28 = sbr.rel (0) target = $region29
    $region28: #{tpu_custom_call.1} parent=1 // pred_region
      _
    $region29: #{tpu_custom_call.1} parent=1 // pred_fallthru
      _
    // Predicated region
    $region30: #{tpu_custom_call.1} parent=1 // pred_check
      _
    $region31: #{tpu_custom_call.1} parent=1 // pred_check_branch
      %30 = sbr.rel (0) target = $region33
    $region32: #{tpu_custom_call.1} parent=1 // pred_region
      _
    $region33: #{tpu_custom_call.1} parent=1 // pred_fallthru
      _
    // Predicated region
    $region34: #{tpu_custom_call.1} parent=1 // pred_check
      _
    $region35: #{tpu_custom_call.1} parent=1 // pred_check_branch
      %32 = sbr.rel (0) target = $region37
    $region36: #{tpu_custom_call.1} parent=1 // pred_region
      _
    $region37: #{tpu_custom_call.1} parent=1 // pred_fallthru
      _
    %v33 = vld [vmem:[%s1] sm:$0xff]
    %v34 = vld [vmem:[%s1 + $0x8] sm:$0xff]
    %v35 = vld [vmem:[%s1 + $0x10] sm:$0xff]
    %v36 = vld [vmem:[%s1 + $0x18] sm:$0xff]
    %v37 = vld [vmem:[%s1 + $0x20] sm:$0xff]
    %v38 = vld [vmem:[%s1 + $0x28] sm:$0xff]
    %v39 = vld [vmem:[%s1 + $0x30] sm:$0xff]
    %v40 = vld [vmem:[%s1 + $0x38] sm:$0xff]
    %v41 = vld [vmem:[%s0] sm:$0xff]
    %v42 = vld [vmem:[%s0 + $0x8] sm:$0xff]
    %v43 = vld [vmem:[%s0 + $0x10] sm:$0xff]
    %v44 = vld [vmem:[%s0 + $0x18] sm:$0xff]
    %v45 = vld [vmem:[%s2] sm:$0xff]
    %v46 = vld [vmem:[%s2 + $0x8] sm:$0xff]
    %v47 = vld [vmem:[%s2 + $0x10] sm:$0xff]
    %v48 = vld [vmem:[%s2 + $0x18] sm:$0xff]
    %v49 = vld [vmem:[%s2 + $0x20] sm:$0xff]
    %v50 = vld [vmem:[%s2 + $0x28] sm:$0xff]
    %v51 = vld [vmem:[%s2 + $0x30] sm:$0xff]
    %v52 = vld [vmem:[%s2 + $0x38] sm:$0xff]
    %54 = vset.pattern.permute.xlu0 0
    %55 = vperm.xlu0 %54, %v45
    %v56 = vpop.permute.xlu0 %55
    %59 = vset.pattern.permute.xlu0 0
    %60 = vperm.xlu0 %59, %v46
    %v61 = vpop.permute.xlu0 %60
    %64 = vset.pattern.permute.xlu0 0
    %65 = vperm.xlu0 %64, %v47
    %v66 = vpop.permute.xlu0 %65
    %69 = vset.pattern.permute.xlu0 0
    %70 = vperm.xlu0 %69, %v48
    %v71 = vpop.permute.xlu0 %70
    %74 = vset.pattern.permute.xlu0 0
    %75 = vperm.xlu0 %74, %v49
    %v76 = vpop.permute.xlu0 %75
    %79 = vset.pattern.permute.xlu0 0
    %80 = vperm.xlu0 %79, %v50
    %v81 = vpop.permute.xlu0 %80
    %84 = vset.pattern.permute.xlu0 0
    %85 = vperm.xlu0 %84, %v51
    %v86 = vpop.permute.xlu0 %85
    %89 = vset.pattern.permute.xlu0 0
    %90 = vperm.xlu0 %89, %v52
    %v91 = vpop.permute.xlu0 %90
    %vm93 = vcmask 261120
    %v95 = vsel %vm93, %v33, 0
    %v98 = vsel %vm93, %v34, 0
    %v101 = vsel %vm93, %v35, 0
    %v104 = vsel %vm93, %v36, 0
    %v107 = vsel %vm93, %v37, 0
    %v110 = vsel %vm93, %v38, 0
    %v113 = vsel %vm93, %v39, 0
    %v116 = vsel %vm93, %v40, 0
    %118 = vmatprep.subr.mxu0 0.0
    %119 = vmatpush1.msra.mxu0 %v41
    %120 = vmatprep.subr.mxu0 0.0
    %121 = vmatpush1.msra.mxu0 %v42
    %122 = vmatprep.subr.mxu0 0.0
    %123 = vmatpush1.msra.mxu0 %v43
    %124 = vmatprep.subr.mxu0 0.0
    %125 = vmatpush1.msra.mxu0 %v44
    %126 = vmatprep.subr.mxu0 0.0
    %127 = vmatpush1.msra.mxu0 0.0
    %128 = vmatprep.subr.mxu0 0.0
    %129 = vmatpush1.msra.mxu0 0.0
    %130 = vmatprep.subr.mxu0 0.0
    %131 = vmatpush1.msra.mxu0 0.0
    %132 = vmatprep.subr.mxu0 0.0
    %133 = vmatpush1.msra.mxu0 0.0
    %134 = vmatprep.subr.mxu0 0.0
    %135 = vmatpush1.msra.mxu0 0.0
    %136 = vmatprep.subr.mxu0 0.0
    %137 = vmatpush1.msra.mxu0 0.0
    %138 = vmatprep.subr.mxu0 0.0
    %139 = vmatpush1.msra.mxu0 0.0
    %140 = vmatprep.subr.mxu0 0.0
    %141 = vmatpush1.msra.mxu0 0.0
    %142 = vmatprep.subr.mxu0 0.0
    %143 = vmatpush1.msra.mxu0 0.0
    %144 = vmatprep.subr.mxu0 0.0
    %145 = vmatpush1.msra.mxu0 0.0
    %146 = vmatprep.subr.mxu0 0.0
    %147 = vmatpush1.msra.mxu0 0.0
    %148 = vmatprep.subr.mxu0 0.0
    %149 = vmatpush1.msra.mxu0 0.0
    %150 = vmatprep.subr.mxu0 0.0
    %151 = vmatpush1.msra.mxu0 0.0
    %152 = vmatprep.subr.mxu0 0.0
    %153 = vmatpush1.msra.mxu0 0.0
    %154 = vmatprep.subr.mxu0 0.0
    %155 = vmatpush1.msra.mxu0 0.0
    %156 = vmatprep.subr.mxu0 0.0
    %157 = vmatpush1.msra.mxu0 0.0
    %158 = vmatprep.subr.mxu0 0.0
    %159 = vmatpush1.msra.mxu0 0.0
    %160 = vmatprep.subr.mxu0 0.0
    %161 = vmatpush1.msra.mxu0 0.0
    %162 = vmatprep.subr.mxu0 0.0
    %163 = vmatpush1.msra.mxu0 0.0
    %164 = vmatprep.subr.mxu0 0.0
    %165 = vmatpush1.msra.mxu0 0.0
    %166 = vmatprep.subr.mxu0 0.0
    %167 = vmatpush1.msra.mxu0 0.0
    %168 = vmatprep.subr.mxu0 0.0
    %169 = vmatpush1.msra.mxu0 0.0
    %170 = vmatprep.subr.mxu0 0.0
    %171 = vmatpush1.msra.mxu0 0.0
    %172 = vmatprep.subr.mxu0 0.0
    %173 = vmatpush1.msra.mxu0 0.0
    %174 = vmatprep.subr.mxu0 0.0
    %175 = vmatpush1.msra.mxu0 0.0
    %176 = vmatprep.subr.mxu0 0.0
    %177 = vmatpush1.msra.mxu0 0.0
    %178 = vmatprep.subr.mxu0 0.0
    %179 = vmatpush1.msra.mxu0 0.0
    %180 = vmatprep.subr.mxu0 0.0
    %181 = vmatpush1.msra.mxu0 0.0
    %182 = vmatprep.mubr.f32.mxu0 0.0
    %183 = vmatmul.mubr.f32.gmra.mrb[0].mxu0 %v95
    %v184 = vpop.f32.mrb[0].mxu0
    %v185 = vadd.f32 %v56, %v184
    %v186 = vpop.f32.mrb[0].mxu0
    %187 = vmatprep.mubr.f32.mxu0 0.0
    %188 = vmatmul.mubr.f32.gmra.mrb[0].mxu0 %v98
    %v189 = vpop.f32.mrb[0].mxu0
    %v190 = vadd.f32 %v61, %v189
    %v191 = vpop.f32.mrb[0].mxu0
    %192 = vmatprep.mubr.f32.mxu0 0.0
    %193 = vmatmul.mubr.f32.gmra.mrb[0].mxu0 %v101
    %v194 = vpop.f32.mrb[0].mxu0
    %v195 = vadd.f32 %v66, %v194
    %v196 = vpop.f32.mrb[0].mxu0
    %197 = vmatprep.mubr.f32.mxu0 0.0
    %198 = vmatmul.mubr.f32.gmra.mrb[0].mxu0 %v104
    %v199 = vpop.f32.mrb[0].mxu0
    %v200 = vadd.f32 %v71, %v199
    %v201 = vpop.f32.mrb[0].mxu0
    %202 = vmatprep.mubr.f32.mxu0 0.0
    %203 = vmatmul.mubr.f32.gmra.mrb[0].mxu0 %v107
    %v204 = vpop.f32.mrb[0].mxu0
    %v205 = vadd.f32 %v76, %v204
    %v206 = vpop.f32.mrb[0].mxu0
    %207 = vmatprep.mubr.f32.mxu0 0.0
    %208 = vmatmul.mubr.f32.gmra.mrb[0].mxu0 %v110
    %v209 = vpop.f32.mrb[0].mxu0
    %v210 = vadd.f32 %v81, %v209
    %v211 = vpop.f32.mrb[0].mxu0
    %212 = vmatprep.mubr.f32.mxu0 0.0
    %213 = vmatmul.mubr.f32.gmra.mrb[0].mxu0 %v113
    %v214 = vpop.f32.mrb[0].mxu0
    %v215 = vadd.f32 %v86, %v214
    %v216 = vpop.f32.mrb[0].mxu0
    %217 = vmatprep.mubr.f32.mxu0 0.0
    %218 = vmatmul.mubr.f32.gmra.mrb[0].mxu0 %v116
    %v219 = vpop.f32.mrb[0].mxu0
    %v220 = vadd.f32 %v91, %v219
    %v221 = vpop.f32.mrb[0].mxu0
    %222 = vdwg.mxu0
    %v223 = vtanh.pop %v185
    %v224 = vtanh.pop %v190
    %v225 = vtanh.pop %v195
    %v226 = vtanh.pop %v200
    %v227 = vtanh.pop %v205
    %v228 = vtanh.pop %v210
    %v229 = vtanh.pop %v215
    %v230 = vtanh.pop %v220
    %v231 = vld [vmem:[%s3] sm:$0xff]
    %v232 = vld [vmem:[%s3 + $0x8] sm:$0xff]
    %v233 = vld [vmem:[%s3 + $0x10] sm:$0xff]
    %v234 = vld [vmem:[%s3 + $0x18] sm:$0xff]
    %v235 = vld [vmem:[%s3 + $0x20] sm:$0xff]
    %v236 = vld [vmem:[%s3 + $0x28] sm:$0xff]
    %v237 = vld [vmem:[%s3 + $0x30] sm:$0xff]
    %v238 = vld [vmem:[%s3 + $0x38] sm:$0xff]
    %v239 = vld [vmem:[%s4] sm:$0xff]
    %v240 = vld [vmem:[%s4 + $0x8] sm:$0xff]
    %v241 = vld [vmem:[%s4 + $0x10] sm:$0xff]
    %v242 = vld [vmem:[%s4 + $0x18] sm:$0xff]
    %v243 = vld [vmem:[%s4 + $0x20] sm:$0xff]
    %v244 = vld [vmem:[%s4 + $0x28] sm:$0xff]
    %v245 = vld [vmem:[%s4 + $0x30] sm:$0xff]
    %v246 = vld [vmem:[%s4 + $0x38] sm:$0xff]
    %248 = vset.pattern.permute.xlu0 0
    %249 = vperm.xlu0 %248, %v239
    %v250 = vpop.permute.xlu0 %249
    %253 = vset.pattern.permute.xlu0 0
    %254 = vperm.xlu0 %253, %v240
    %v255 = vpop.permute.xlu0 %254
    %258 = vset.pattern.permute.xlu0 0
    %259 = vperm.xlu0 %258, %v241
    %v260 = vpop.permute.xlu0 %259
    %263 = vset.pattern.permute.xlu0 0
    %264 = vperm.xlu0 %263, %v242
    %v265 = vpop.permute.xlu0 %264
    %268 = vset.pattern.permute.xlu0 0
    %269 = vperm.xlu0 %268, %v243
    %v270 = vpop.permute.xlu0 %269
    %273 = vset.pattern.permute.xlu0 0
    %274 = vperm.xlu0 %273, %v244
    %v275 = vpop.permute.xlu0 %274
    %278 = vset.pattern.permute.xlu0 0
    %279 = vperm.xlu0 %278, %v245
    %v280 = vpop.permute.xlu0 %279
    %283 = vset.pattern.permute.xlu0 0
    %284 = vperm.xlu0 %283, %v246
    %v285 = vpop.permute.xlu0 %284
    %vm287 = vcmask 523264
    %v289 = vsel %vm287, %v231, 0
    %v292 = vsel %vm287, %v232, 0
    %v295 = vsel %vm287, %v233, 0
    %v298 = vsel %vm287, %v234, 0
    %v301 = vsel %vm287, %v235, 0
    %v304 = vsel %vm287, %v236, 0
    %v307 = vsel %vm287, %v237, 0
    %v310 = vsel %vm287, %v238, 0
    %312 = vmatprep.subr.mxu0 0.0
    %313 = vmatpush1.msra.mxu0 %v223
    %314 = vmatprep.subr.mxu0 0.0
    %315 = vmatpush1.msra.mxu0 %v224
    %316 = vmatprep.subr.mxu0 0.0
    %317 = vmatpush1.msra.mxu0 %v225
    %318 = vmatprep.subr.mxu0 0.0
    %319 = vmatpush1.msra.mxu0 %v226
    %320 = vmatprep.subr.mxu0 0.0
    %321 = vmatpush1.msra.mxu0 %v227
    %322 = vmatprep.subr.mxu0 0.0
    %323 = vmatpush1.msra.mxu0 %v228
    %324 = vmatprep.subr.mxu0 0.0
    %325 = vmatpush1.msra.mxu0 %v229
    %326 = vmatprep.subr.mxu0 0.0
    %327 = vmatpush1.msra.mxu0 %v230
    %328 = vmatprep.subr.mxu0 0.0
    %329 = vmatpush1.msra.mxu0 0.0
    %330 = vmatprep.subr.mxu0 0.0
    %331 = vmatpush1.msra.mxu0 0.0
    %332 = vmatprep.subr.mxu0 0.0
    %333 = vmatpush1.msra.mxu0 0.0
    %334 = vmatprep.subr.mxu0 0.0
    %335 = vmatpush1.msra.mxu0 0.0
    %336 = vmatprep.subr.mxu0 0.0
    %337 = vmatpush1.msra.mxu0 0.0
    %338 = vmatprep.subr.mxu0 0.0
    %339 = vmatpush1.msra.mxu0 0.0
    %340 = vmatprep.subr.mxu0 0.0
    %341 = vmatpush1.msra.mxu0 0.0
    %342 = vmatprep.subr.mxu0 0.0
    %343 = vmatpush1.msra.mxu0 0.0
    %344 = vmatprep.subr.mxu0 0.0
    %345 = vmatpush1.msra.mxu0 0.0
    %346 = vmatprep.subr.mxu0 0.0
    %347 = vmatpush1.msra.mxu0 0.0
    %348 = vmatprep.subr.mxu0 0.0
    %349 = vmatpush1.msra.mxu0 0.0
    %350 = vmatprep.subr.mxu0 0.0
    %351 = vmatpush1.msra.mxu0 0.0
    %352 = vmatprep.subr.mxu0 0.0
    %353 = vmatpush1.msra.mxu0 0.0
    %354 = vmatprep.subr.mxu0 0.0
    %355 = vmatpush1.msra.mxu0 0.0
    %356 = vmatprep.subr.mxu0 0.0
    %357 = vmatpush1.msra.mxu0 0.0
    %358 = vmatprep.subr.mxu0 0.0
    %359 = vmatpush1.msra.mxu0 0.0
    %360 = vmatprep.subr.mxu0 0.0
    %361 = vmatpush1.msra.mxu0 0.0
    %362 = vmatprep.subr.mxu0 0.0
    %363 = vmatpush1.msra.mxu0 0.0
    %364 = vmatprep.subr.mxu0 0.0
    %365 = vmatpush1.msra.mxu0 0.0
    %366 = vmatprep.subr.mxu0 0.0
    %367 = vmatpush1.msra.mxu0 0.0
    %368 = vmatprep.subr.mxu0 0.0
    %369 = vmatpush1.msra.mxu0 0.0
    %370 = vmatprep.subr.mxu0 0.0
    %371 = vmatpush1.msra.mxu0 0.0
    %372 = vmatprep.subr.mxu0 0.0
    %373 = vmatpush1.msra.mxu0 0.0
    %374 = vmatprep.subr.mxu0 0.0
    %375 = vmatpush1.msra.mxu0 0.0
    %376 = vmatprep.mubr.f32.mxu0 0.0
    %377 = vmatmul.mubr.f32.gmra.mrb[0].mxu0 %v289
    %v378 = vpop.f32.mrb[0].mxu0
    %v379 = vadd.f32 %v250, %v378
    %v380 = vpop.f32.mrb[0].mxu0
    %381 = vmatprep.mubr.f32.mxu0 0.0
    %382 = vmatmul.mubr.f32.gmra.mrb[0].mxu0 %v292
    %v383 = vpop.f32.mrb[0].mxu0
    %v384 = vadd.f32 %v255, %v383
    %v385 = vpop.f32.mrb[0].mxu0
    %386 = vmatprep.mubr.f32.mxu0 0.0
    %387 = vmatmul.mubr.f32.gmra.mrb[0].mxu0 %v295
    %v388 = vpop.f32.mrb[0].mxu0
    %v389 = vadd.f32 %v260, %v388
    %v390 = vpop.f32.mrb[0].mxu0
    %391 = vmatprep.mubr.f32.mxu0 0.0
    %392 = vmatmul.mubr.f32.gmra.mrb[0].mxu0 %v298
    %v393 = vpop.f32.mrb[0].mxu0
    %v394 = vadd.f32 %v265, %v393
    %v395 = vpop.f32.mrb[0].mxu0
    %396 = vmatprep.mubr.f32.mxu0 0.0
    %397 = vmatmul.mubr.f32.gmra.mrb[0].mxu0 %v301
    %v398 = vpop.f32.mrb[0].mxu0
    %v399 = vadd.f32 %v270, %v398
    %v400 = vpop.f32.mrb[0].mxu0
    %401 = vmatprep.mubr.f32.mxu0 0.0
    %402 = vmatmul.mubr.f32.gmra.mrb[0].mxu0 %v304
    %v403 = vpop.f32.mrb[0].mxu0
    %v404 = vadd.f32 %v275, %v403
    %v405 = vpop.f32.mrb[0].mxu0
    %406 = vmatprep.mubr.f32.mxu0 0.0
    %407 = vmatmul.mubr.f32.gmra.mrb[0].mxu0 %v307
    %v408 = vpop.f32.mrb[0].mxu0
    %v409 = vadd.f32 %v280, %v408
    %v410 = vpop.f32.mrb[0].mxu0
    %411 = vmatprep.mubr.f32.mxu0 0.0
    %412 = vmatmul.mubr.f32.gmra.mrb[0].mxu0 %v310
    %v413 = vpop.f32.mrb[0].mxu0
    %v414 = vadd.f32 %v285, %v413
    %v415 = vpop.f32.mrb[0].mxu0
    %416 = vdwg.mxu0
    %v417 = vtanh.pop %v379
    %v418 = vtanh.pop %v384
    %v419 = vtanh.pop %v389
    %v420 = vtanh.pop %v394
    %v421 = vtanh.pop %v399
    %v422 = vtanh.pop %v404
    %v423 = vtanh.pop %v409
    %v424 = vtanh.pop %v414
    %v425 = vld [vmem:[%s5] sm:$0x3]
    %v426 = vld [vmem:[%s6] sm:$0x3]
    %428 = vset.pattern.permute.xlu0 0
    %429 = vperm.xlu0 %428, %v426
    %v430 = vpop.permute.xlu0 %429
    %v433 = vsel %vm287, %v425, 0
    %435 = vmatprep.subr.mxu0 0.0
    %436 = vmatpush1.msra.mxu0 %v417
    %437 = vmatprep.subr.mxu0 0.0
    %438 = vmatpush1.msra.mxu0 %v418
    %439 = vmatprep.subr.mxu0 0.0
    %440 = vmatpush1.msra.mxu0 %v419
    %441 = vmatprep.subr.mxu0 0.0
    %442 = vmatpush1.msra.mxu0 %v420
    %443 = vmatprep.subr.mxu0 0.0
    %444 = vmatpush1.msra.mxu0 %v421
    %445 = vmatprep.subr.mxu0 0.0
    %446 = vmatpush1.msra.mxu0 %v422
    %447 = vmatprep.subr.mxu0 0.0
    %448 = vmatpush1.msra.mxu0 %v423
    %449 = vmatprep.subr.mxu0 0.0
    %450 = vmatpush1.msra.mxu0 %v424
    %451 = vmatprep.subr.mxu0 0.0
    %452 = vmatpush1.msra.mxu0 0.0
    %453 = vmatprep.subr.mxu0 0.0
    %454 = vmatpush1.msra.mxu0 0.0
    %455 = vmatprep.subr.mxu0 0.0
    %456 = vmatpush1.msra.mxu0 0.0
    %457 = vmatprep.subr.mxu0 0.0
    %458 = vmatpush1.msra.mxu0 0.0
    %459 = vmatprep.subr.mxu0 0.0
    %460 = vmatpush1.msra.mxu0 0.0
    %461 = vmatprep.subr.mxu0 0.0
    %462 = vmatpush1.msra.mxu0 0.0
    %463 = vmatprep.subr.mxu0 0.0
    %464 = vmatpush1.msra.mxu0 0.0
    %465 = vmatprep.subr.mxu0 0.0
    %466 = vmatpush1.msra.mxu0 0.0
    %467 = vmatprep.subr.mxu0 0.0
    %468 = vmatpush1.msra.mxu0 0.0
    %469 = vmatprep.subr.mxu0 0.0
    %470 = vmatpush1.msra.mxu0 0.0
    %471 = vmatprep.subr.mxu0 0.0
    %472 = vmatpush1.msra.mxu0 0.0
    %473 = vmatprep.subr.mxu0 0.0
    %474 = vmatpush1.msra.mxu0 0.0
    %475 = vmatprep.subr.mxu0 0.0
    %476 = vmatpush1.msra.mxu0 0.0
    %477 = vmatprep.subr.mxu0 0.0
    %478 = vmatpush1.msra.mxu0 0.0
    %479 = vmatprep.subr.mxu0 0.0
    %480 = vmatpush1.msra.mxu0 0.0
    %481 = vmatprep.subr.mxu0 0.0
    %482 = vmatpush1.msra.mxu0 0.0
    %483 = vmatprep.subr.mxu0 0.0
    %484 = vmatpush1.msra.mxu0 0.0
    %485 = vmatprep.subr.mxu0 0.0
    %486 = vmatpush1.msra.mxu0 0.0
    %487 = vmatprep.subr.mxu0 0.0
    %488 = vmatpush1.msra.mxu0 0.0
    %489 = vmatprep.subr.mxu0 0.0
    %490 = vmatpush1.msra.mxu0 0.0
    %491 = vmatprep.subr.mxu0 0.0
    %492 = vmatpush1.msra.mxu0 0.0
    %493 = vmatprep.subr.mxu0 0.0
    %494 = vmatpush1.msra.mxu0 0.0
    %495 = vmatprep.subr.mxu0 0.0
    %496 = vmatpush1.msra.mxu0 0.0
    %497 = vmatprep.subr.mxu0 0.0
    %498 = vmatpush1.msra.mxu0 0.0
    %499 = vmatprep.mubr.f32.mxu0 0.0
    %500 = vmatmul.mubr.f32.gmra.mrb[0].mxu0 %v433
    %v501 = vpop.f32.mrb[0].mxu0
    %v502 = vadd.f32 %v430, %v501
    %v503 = vpop.f32.mrb[0].mxu0
    %504 = vdwg.mxu0
    %v505 = vmul.f32 %v502, 10.0
    %v506 = vmul.f32 %v505, %v502
    %v507 = vadd.f32 %v506, 4.0
    %v508 = vmul.f32 %v502, 0.1
    %v509 = vmul.f32 %v508, %v502
    %v510 = vld [vmem:[%s7] sm:$0x7]
    %v512 = vrot.slane %v507, 5
    %v515 = vrot.slane %v509, 5
    %vm517 = vcmask 1042432
    %v518 = vsel %vm517, %v510, %v512
    %vm519 = vcmask 1043456
    %v520 = vsel %vm519, %v518, %v515
    %v521 = vld [vmem:[%s8] sm:$0xff]
    %v522 = vld [vmem:[%s8 + $0x8] sm:$0xff]
    %vm523 = vcmask 130048
    %v525 = vsel %vm523, %v520, 0
    %527 = vmatprep.subr.mxu0 0.0
    %528 = vmatpush1.msra.mxu0 %v521
    %529 = vmatprep.subr.mxu0 0.0
    %530 = vmatpush1.msra.mxu0 %v522
    %531 = vmatprep.subr.mxu0 0.0
    %532 = vmatpush1.msra.mxu0 0.0
    %533 = vmatprep.subr.mxu0 0.0
    %534 = vmatpush1.msra.mxu0 0.0
    %535 = vmatprep.subr.mxu0 0.0
    %536 = vmatpush1.msra.mxu0 0.0
    %537 = vmatprep.subr.mxu0 0.0
    %538 = vmatpush1.msra.mxu0 0.0
    %539 = vmatprep.subr.mxu0 0.0
    %540 = vmatpush1.msra.mxu0 0.0
    %541 = vmatprep.subr.mxu0 0.0
    %542 = vmatpush1.msra.mxu0 0.0
    %543 = vmatprep.subr.mxu0 0.0
    %544 = vmatpush1.msra.mxu0 0.0
    %545 = vmatprep.subr.mxu0 0.0
    %546 = vmatpush1.msra.mxu0 0.0
    %547 = vmatprep.subr.mxu0 0.0
    %548 = vmatpush1.msra.mxu0 0.0
    %549 = vmatprep.subr.mxu0 0.0
    %550 = vmatpush1.msra.mxu0 0.0
    %551 = vmatprep.subr.mxu0 0.0
    %552 = vmatpush1.msra.mxu0 0.0
    %553 = vmatprep.subr.mxu0 0.0
    %554 = vmatpush1.msra.mxu0 0.0
    %555 = vmatprep.subr.mxu0 0.0
    %556 = vmatpush1.msra.mxu0 0.0
    %557 = vmatprep.subr.mxu0 0.0
    %558 = vmatpush1.msra.mxu0 0.0
    %559 = vmatprep.subr.mxu0 0.0
    %560 = vmatpush1.msra.mxu0 0.0
    %561 = vmatprep.subr.mxu0 0.0
    %562 = vmatpush1.msra.mxu0 0.0
    %563 = vmatprep.subr.mxu0 0.0
    %564 = vmatpush1.msra.mxu0 0.0
    %565 = vmatprep.subr.mxu0 0.0
    %566 = vmatpush1.msra.mxu0 0.0
    %567 = vmatprep.subr.mxu0 0.0
    %568 = vmatpush1.msra.mxu0 0.0
    %569 = vmatprep.subr.mxu0 0.0
    %570 = vmatpush1.msra.mxu0 0.0
    %571 = vmatprep.subr.mxu0 0.0
    %572 = vmatpush1.msra.mxu0 0.0
    %573 = vmatprep.subr.mxu0 0.0
    %574 = vmatpush1.msra.mxu0 0.0
    %575 = vmatprep.subr.mxu0 0.0
    %576 = vmatpush1.msra.mxu0 0.0
    %577 = vmatprep.subr.mxu0 0.0
    %578 = vmatpush1.msra.mxu0 0.0
    %579 = vmatprep.subr.mxu0 0.0
    %580 = vmatpush1.msra.mxu0 0.0
    %581 = vmatprep.subr.mxu0 0.0
    %582 = vmatpush1.msra.mxu0 0.0
    %583 = vmatprep.subr.mxu0 0.0
    %584 = vmatpush1.msra.mxu0 0.0
    %585 = vmatprep.subr.mxu0 0.0
    %586 = vmatpush1.msra.mxu0 0.0
    %587 = vmatprep.subr.mxu0 0.0
    %588 = vmatpush1.msra.mxu0 0.0
    %589 = vmatprep.subr.mxu0 0.0
    %590 = vmatpush1.msra.mxu0 0.0
    %591 = vmatprep.mubr.f32.mxu0 0.0
    %592 = vmatmul.mubr.f32.gmra.mrb[0].mxu0 %v525
    %v593 = vpop.f32.mrb[0].mxu0
    %v594 = vadd.f32 0.0, %v593
    %v595 = vpop.f32.mrb[0].mxu0
    %596 = vdwg.mxu0
    %s597 = scalar_lea.vmem %s8, 16
    %v598 = vld [vmem:[%s597] sm:$0xff]
    %v599 = vld [vmem:[%s597 + $0x8] sm:$0xff]
    %600 = vmatprep.subr.mxu0 0.0
    %601 = vmatpush1.msra.mxu0 %v598
    %602 = vmatprep.subr.mxu0 0.0
    %603 = vmatpush1.msra.mxu0 %v599
    %604 = vmatprep.subr.mxu0 0.0
    %605 = vmatpush1.msra.mxu0 0.0
    %606 = vmatprep.subr.mxu0 0.0
    %607 = vmatpush1.msra.mxu0 0.0
    %608 = vmatprep.subr.mxu0 0.0
    %609 = vmatpush1.msra.mxu0 0.0
    %610 = vmatprep.subr.mxu0 0.0
    %611 = vmatpush1.msra.mxu0 0.0
    %612 = vmatprep.subr.mxu0 0.0
    %613 = vmatpush1.msra.mxu0 0.0
    %614 = vmatprep.subr.mxu0 0.0
    %615 = vmatpush1.msra.mxu0 0.0
    %616 = vmatprep.subr.mxu0 0.0
    %617 = vmatpush1.msra.mxu0 0.0
    %618 = vmatprep.subr.mxu0 0.0
    %619 = vmatpush1.msra.mxu0 0.0
    %620 = vmatprep.subr.mxu0 0.0
    %621 = vmatpush1.msra.mxu0 0.0
    %622 = vmatprep.subr.mxu0 0.0
    %623 = vmatpush1.msra.mxu0 0.0
    %624 = vmatprep.subr.mxu0 0.0
    %625 = vmatpush1.msra.mxu0 0.0
    %626 = vmatprep.subr.mxu0 0.0
    %627 = vmatpush1.msra.mxu0 0.0
    %628 = vmatprep.subr.mxu0 0.0
    %629 = vmatpush1.msra.mxu0 0.0
    %630 = vmatprep.subr.mxu0 0.0
    %631 = vmatpush1.msra.mxu0 0.0
    %632 = vmatprep.subr.mxu0 0.0
    %633 = vmatpush1.msra.mxu0 0.0
    %634 = vmatprep.subr.mxu0 0.0
    %635 = vmatpush1.msra.mxu0 0.0
    %636 = vmatprep.subr.mxu0 0.0
    %637 = vmatpush1.msra.mxu0 0.0
    %638 = vmatprep.subr.mxu0 0.0
    %639 = vmatpush1.msra.mxu0 0.0
    %640 = vmatprep.subr.mxu0 0.0
    %641 = vmatpush1.msra.mxu0 0.0
    %642 = vmatprep.subr.mxu0 0.0
    %643 = vmatpush1.msra.mxu0 0.0
    %644 = vmatprep.subr.mxu0 0.0
    %645 = vmatpush1.msra.mxu0 0.0
    %646 = vmatprep.subr.mxu0 0.0
    %647 = vmatpush1.msra.mxu0 0.0
    %648 = vmatprep.subr.mxu0 0.0
    %649 = vmatpush1.msra.mxu0 0.0
    %650 = vmatprep.subr.mxu0 0.0
    %651 = vmatpush1.msra.mxu0 0.0
    %652 = vmatprep.subr.mxu0 0.0
    %653 = vmatpush1.msra.mxu0 0.0
    %654 = vmatprep.subr.mxu0 0.0
    %655 = vmatpush1.msra.mxu0 0.0
    %656 = vmatprep.subr.mxu0 0.0
    %657 = vmatpush1.msra.mxu0 0.0
    %658 = vmatprep.subr.mxu0 0.0
    %659 = vmatpush1.msra.mxu0 0.0
    %660 = vmatprep.subr.mxu0 0.0
    %661 = vmatpush1.msra.mxu0 0.0
    %662 = vmatprep.subr.mxu0 0.0
    %663 = vmatpush1.msra.mxu0 0.0
    %664 = vmatprep.mubr.f32.mxu0 0.0
    %665 = vmatmul.mubr.f32.gmra.mrb[0].mxu0 %v525
    %v666 = vpop.f32.mrb[0].mxu0
    %v667 = vadd.f32 0.0, %v666
    %v668 = vpop.f32.mrb[0].mxu0
    %669 = vdwg.mxu0
    %v670 = vsub.f32 %v667, %v594
    %v671 = vmul.f32 %v670, %v670
    %v673 = vrot.slane %v671, 1
    %v675 = vadd.f32 %v671, %v673
    %v676 = vrot.slane %v671, 2
    %v678 = vadd.f32 %v675, %v676
    %v679 = vmul.f32 %v594, %v667
    %v681 = vrot.slane %v678, 5
    %v683 = vrcp.pop %v681
    %v684 = vmul.f32 %v679, %v683
    %v685 = vmul.f32 %v684, %v684
    %v686 = vmul.f32 %v685, %v684
    %v687 = vrsqrt.pop %v679
    %v688 = vmul.f32 %v679, %v687
    %vm689 = vcmp.eq.f32.partialorder %v679, inf
    %v690 = vsel %vm689, %v679, %v688
    %vm691 = vcmp.eq.f32.partialorder %v679, 0.0
    %v692 = vand.u32 %v679, 2147483648
    %v693 = vsel %vm691, %v692, %v690
    %v694 = vmul.f32 %v693, 4.0
    %v695 = vmul.f32 %v686, %v686
    %v696 = vsub.f32 %v695, %v686
    %v698 = vrot.slane %v696, 7
    %v700 = vmul.f32 %v694, %v698
    %v701 = vlaneseq
    %v702 = vand.u32 %v701, 127
    %vm703 = vcmp.ge.s32.totalorder %v702, 0
    %vm704 = vcmp.lt.s32.totalorder %v702, 28
    %vm705 = vmand %vm703, %vm704
    %v706 = vsel %vm705, %v700, 0.0
    %vm707 = vcmask 454660
    %v708 = vsel %vm707, %v706, 0.0
    %709 = vadd.xlane.f32.xlu0 %v708
    %v710 = vpop.xlane.xlu0 %709
    %vm711 = vcmp.ge.s32.totalorder %v702, 28
    %vm712 = vcmp.lt.s32.totalorder %v702, 56
    %vm713 = vmand %vm711, %vm712
    %v714 = vsel %vm713, %v700, 0.0
    %v715 = vsel %vm707, %v714, 0.0
    %716 = vadd.xlane.f32.xlu0 %v715
    %v717 = vpop.xlane.xlu0 %716
    %vm718 = vcmask 7168
    %v719 = vsel %vm718, %v710, %v717
    %vm720 = vcmask 12292
    %721 = vst.msk [vmem:[#allocation2 - $0x4] sm:$0x10] %vm720, %v719
    // Predicated region
    $region38: #{tpu_custom_call.1} parent=1 // pred_check
      _
    $region39: #{tpu_custom_call.1} parent=1 // pred_check_branch
      %723 = sbr.rel (0) target = $region41
    $region40: #{tpu_custom_call.1} parent=1 // pred_region
      %s725 = ssub.s32 16, 16
      %726 = vsyncadd [#allocation3], %s725
      %s728 = sshll.u32 [#allocation2], 4
      %s729 = int_to_ptr.vmem [resolvable:$true] %s728
      %731 = dma.vmem_to_hbm [thread:$0]  %s729, 16, %s9, [#allocation3]
    $region41: #{tpu_custom_call.1} parent=1 // pred_fallthru
      _
    // Predicated region
    $region42: #{tpu_custom_call.1} parent=1 // pred_check
      _
    $region43: #{tpu_custom_call.1} parent=1 // pred_check_branch
      %733 = sbr.rel (0) target = $region45
    $region44: #{tpu_custom_call.1} parent=1 // pred_region
      %734 = dma.done [#allocation3], 16
    $region45: #{tpu_custom_call.1} parent=1 // pred_fallthru
      _
    %735 = vsyncpa [#allocation3], 1

</llo_original>
